<compile_context>
chip_gen: v7x
topology: tpu7x:2x2x1
jax: 0.10.0
libtpu: 0.0.40
codegen_flags: <defaults>
</compile_context>

<pallas_src>
import jax
import jax.numpy as jnp
from jax.experimental import pallas as pl
from jax.experimental.pallas import tpu as pltpu


_LANES = 1024          # lane-dense last dim (multiple of 128) -> unmasked full-width vst
_MAX_TILE_ROWS = 512   # 512 x 1024 f32 = 2 MiB per block


def _make_sco_relu_kernel(s, b, compute_dtype):
    """Builds the kernel body with static scalars s, b closed over."""
    s = float(s)
    b = float(b)

    if b == 0.0:
        # Degenerate case: the piecewise form collapses to a hard clamp to [-s, s]
        # (matches the PyTorch limit behaviour and avoids 1/0 constants).
        def clamp_kernel(x_ref, y_ref):
            x = x_ref[...].astype(compute_dtype)
            y_ref[...] = jnp.clip(x, -s, s).astype(y_ref.dtype)

        return clamp_kernel

    inv_b = 1.0 / b
    c = (s - b) * inv_b       # (s - b) / b precomputed -> no per-element divide
    thresh = s - b

    def kernel(x_ref, y_ref):
        x = x_ref[...].astype(compute_dtype)
        ax = jnp.abs(x)
        # One exp per element via symmetry hi(x) = -lo(-x):
        #   e = lo(-|x|) = b * exp((s - b - |x|) / b) - s
        e = b * jnp.exp(c - ax * inv_b) - s
        tail = jnp.where(x < 0, e, -e)
        # Strict inequalities |x| > s - b  <=>  (x < -s + b) or (x > s - b),
        # identical boundary behaviour to the PyTorch reference.
        y = jnp.where(ax > thresh, tail, x)
        y_ref[...] = y.astype(y_ref.dtype)

    return kernel


def sco_relu_pallas(x, s, b):
    """Apply SCO_ReLU elementwise to an arbitrary-shaped array x."""
    if s <= 0:
        raise ValueError("s must be > 0")
    if b > s:
        raise ValueError("b must be <= s")
    if b < 0:
        raise ValueError("b must be >= 0")

    orig_shape = x.shape
    orig_dtype = x.dtype
    n = x.size

    # Keep HBM traffic in the input dtype; compute in f32 for sub-32-bit floats.
    if jnp.issubdtype(orig_dtype, jnp.floating) and jnp.dtype(orig_dtype).itemsize < 4:
        compute_dtype = jnp.float32
    else:
        compute_dtype = orig_dtype

    x_flat = x.reshape(-1)                        # free for contiguous inputs

    # Lane width: wide slabs for real workloads, 128 for tiny tensors to limit padding.
    lanes = _LANES if n >= 8 * _LANES else 128
    rows = -(-n // lanes)                         # cdiv

    if rows >= 2 * _MAX_TILE_ROWS:
        tile_rows = _MAX_TILE_ROWS
    else:
        # Small/medium tensor: aim for 2 grid steps (v7x megacore) with 8-row alignment.
        half = -(-rows // 2)
        tile_rows = max(8, -(-half // 8) * 8)

    rows_pad = -(-rows // tile_rows) * tile_rows
    n_pad = rows_pad * lanes

    if n_pad != n:
        # Pad only when needed, and by at most one block.
        x_flat = jnp.pad(x_flat, (0, n_pad - n))
    x2d = x_flat.reshape(rows_pad, lanes)         # free reshape when no padding

    grid = (rows_pad // tile_rows,)

    y2d = pl.pallas_call(
        _make_sco_relu_kernel(s, b, compute_dtype),
        out_shape=jax.ShapeDtypeStruct((rows_pad, lanes), orig_dtype),
        grid_spec=pltpu.PrefetchScalarGridSpec(
            num_scalar_prefetch=0,
            grid=grid,
            in_specs=[pl.BlockSpec((tile_rows, lanes), lambda i: (i, 0))],
            out_specs=pl.BlockSpec((tile_rows, lanes), lambda i: (i, 0)),
        ),
        compiler_params=pltpu.CompilerParams(
            dimension_semantics=("parallel",),
        ),
    )(x2d)

    y_flat = y2d.reshape(-1)
    if n_pad != n:
        y_flat = y_flat[:n]
    return y_flat.reshape(orig_shape)


def sco_relu_reference(x, s, b):
    """Pure-JAX reference mirroring the PyTorch forward."""
    xf = x.astype(jnp.float32)
    if b == 0:
        return jnp.clip(xf, -s, s).astype(x.dtype)
    lo = b * jnp.exp((xf + s - b) / b) - s
    hi = -b * jnp.exp((-xf + s - b) / b) + s
    y = jnp.where(xf < (-s + b), lo, jnp.where(xf > (s - b), hi, xf))
    return y.astype(x.dtype)


if __name__ == "__main__":
    key = jax.random.PRNGKey(0)
    # NCHW input like a typical conv activation.
    x = jax.random.normal(key, (2, 4, 16, 16), dtype=jnp.float32) * 2.0
    s, b = 1.0, 0.5

    y = jax.block_until_ready(sco_relu_pallas(x, s, b))
    y_ref = sco_relu_reference(x, s, b)
    assert y.shape == x.shape and y.dtype == x.dtype
    assert jnp.max(jnp.abs(y - y_ref)) < 1e-5

    # Exercise the non-lane-aligned (padding) path as well.
    x2 = jax.random.normal(jax.random.PRNGKey(1), (3, 5, 7, 11), dtype=jnp.float32) * 2.0
    y2 = jax.block_until_ready(sco_relu_pallas(x2, s, b))
    assert jnp.max(jnp.abs(y2 - sco_relu_reference(x2, s, b))) < 1e-5

    print("KERNEL_OK")
</pallas_src>

<mosaic_0001>
module attributes {stable_mosaic.version = 11 : i64} {
  func.func @kernel(%arg0: i32, %arg1: memref<8x128xf32, #tpu.memory_space<vmem>>, %arg2: memref<8x128xf32, #tpu.memory_space<vmem>>) attributes {dimension_semantics = [#tpu.dimension_semantics<parallel>], iteration_bounds = array<i64: 2>, scalar_prefetch = 0 : i64, scratch_operands = 0 : i64, tpu.core_type = #tpu.core_type<tc>, window_params = [{transform_indices = @transform_0, window_bounds = array<i64: 8, 128>}, {transform_indices = @transform_1, window_bounds = array<i64: 8, 128>}]} {
    %c0 = arith.constant 0 : index
    %c0_0 = arith.constant 0 : index
    %0 = vector.load %arg1[%c0, %c0_0] : memref<8x128xf32, #tpu.memory_space<vmem>>, vector<8x128xf32>
    %1 = math.absf %0 : vector<8x128xf32>
    %cst = arith.constant 2.000000e+00 : f32
    %2 = vector.broadcast %cst : f32 to vector<8x128xf32>
    %3 = arith.mulf %1, %2 : vector<8x128xf32>
    %cst_1 = arith.constant 1.000000e+00 : f32
    %4 = vector.broadcast %cst_1 : f32 to vector<8x128xf32>
    %5 = arith.subf %4, %3 : vector<8x128xf32>
    %6 = math.exp %5 : vector<8x128xf32>
    %cst_2 = arith.constant 5.000000e-01 : f32
    %7 = vector.broadcast %cst_2 : f32 to vector<8x128xf32>
    %8 = arith.mulf %7, %6 : vector<8x128xf32>
    %cst_3 = arith.constant 1.000000e+00 : f32
    %9 = vector.broadcast %cst_3 : f32 to vector<8x128xf32>
    %10 = arith.subf %8, %9 : vector<8x128xf32>
    %cst_4 = arith.constant 0.000000e+00 : f32
    %11 = vector.broadcast %cst_4 : f32 to vector<8x128xf32>
    %12 = arith.cmpf olt, %0, %11 : vector<8x128xf32>
    %cst_5 = arith.constant 0.000000e+00 : f32
    %13 = vector.broadcast %cst_5 : f32 to vector<8x128xf32>
    %14 = arith.subf %13, %10 : vector<8x128xf32>
    %15 = arith.select %12, %10, %14 : vector<8x128xi1>, vector<8x128xf32>
    %cst_6 = arith.constant 5.000000e-01 : f32
    %16 = vector.broadcast %cst_6 : f32 to vector<8x128xf32>
    %17 = arith.cmpf ogt, %1, %16 : vector<8x128xf32>
    %18 = arith.select %17, %15, %0 : vector<8x128xi1>, vector<8x128xf32>
    %c0_7 = arith.constant 0 : index
    %c0_8 = arith.constant 0 : index
    %19 = vector.load %arg2[%c0_7, %c0_8] : memref<8x128xf32, #tpu.memory_space<vmem>>, vector<8x128xf32>
    tpu.vector_store %arg2[%c0_7, %c0_8], %18 {strides = array<i32>} : memref<8x128xf32, #tpu.memory_space<vmem>>, vector<8x128xf32>,
    return
  }
  func.func @transform_0(%arg0: i32) -> (i32, i32) {
    %c0_i32 = arith.constant 0 : i32
    %c0_i32_0 = arith.constant 0 : i32
    return %arg0, %c0_i32 : i32, i32
  }
  func.func @transform_1(%arg0: i32) -> (i32, i32) {
    %c0_i32 = arith.constant 0 : i32
    %c0_i32_0 = arith.constant 0 : i32
    return %arg0, %c0_i32 : i32, i32
  }
}

</mosaic_0001>

<llo_original>
// kernel: tpu_custom_call.1
$region0: #{tpu_custom_call.1}
  #allocation0 [shape = 'u32[]', space=smem, size = 0x4, offset = 0x4, fixed_abs, tag = 'smem constant byte address 0x4 - core index']
  #allocation1 [shape = 'u32[144,128]{1,0:T(1,128)}', space=vmem, size = 0x12000, scoped, tag = 'internal scratch']
  %s0 = inlined_call_operand.hbm [shape: f32[16,128], index: 0, kind: input, shape index: {}]
  %s1 = inlined_call_operand.hbm [shape: f32[16,128], index: 1, kind: output, shape index: {}]
  %s2 = sld [smem:[#allocation0]]
  $region41: #{tpu_custom_call.1} parent=0
    _
  %s4 = ssub.s32 1, %s2
  %s5 = scalar_select 0, %s4, %s2
  $region1: #{tpu_custom_call.1} parent=0
    #allocation2 [shape = 'u8[8192]{0}', space=vmem, size = 0x2000, scoped, tag = 'input window, operand 0']
    #allocation3 [shape = 's32[2]{0}', space=sflag, size = 0x8, scoped, tag = 'scoped memory for tpu_custom_call.1']
    #allocation4 [shape = 's32[2]{0}', space=sflag, size = 0x8, scoped, tag = 'scoped memory for tpu_custom_call.1']
    #allocation5 [shape = 'u8[8192]{0}', space=vmem, size = 0x2000, scoped, tag = 'output window, operand 0']
    %6 = vsyncpa [#allocation3], 0
    %s7 = scalar_lea.sflag [#allocation3], 1
    %8 = vsyncpa %s7, 0
    %9 = vsyncpa [#allocation4], 0
    %s10 = scalar_lea.sflag [#allocation4], 1
    %11 = vsyncpa %s10, 0
    loop: start=0, step=1, limit=4
    $region2: #{tpu_custom_call.1} parent=1 // loop_pre_header
      _
    $region3: #{tpu_custom_call.1} parent=1 // loop_header
      %s13 = sphi 0, %s17
      %p14 = scmp.ge.s32.totalorder %s13, 4
      %s23 = sphi 0, %s25
      %s26 = sphi 0, %s23
      %s27 = sphi 0, %s26
      %s43 = sphi 0, %s27
      %s49 = sphi 0, %s51
      %s52 = sphi 0, %s49
      %s53 = sphi 0, %s52
      %s69 = sphi 0, %s53
    $region4: #{tpu_custom_call.1} parent=1 // loop_header_branch
      %16 = sbr.rel (%p14) target = $region8
    $region5: #{tpu_custom_call.1} parent=1 // loop_body
      %s18 = ssub.s32 %s13, 1
      %s19 = ssub.s32 %s13, 2
      %s20 = sadd.s32 %s13, 1
      %s21 = ssub.s32 %s13, %s20
      %p22 = scmp.eq.s32.totalorder %s21, 0
      %s24 = sadd.s32 %s23, 1
      %s25 = scalar_select %p22, %s23, %s24
      %p28 = pneg %p22
      %p29 = scmp.eq.s32.totalorder %s13, 1
      %p30 = por %p28, %p29
      %p31 = scmp.ne.s32.totalorder %s23, %s26
      %p32 = scmp.eq.s32.totalorder %s13, 0
      %p33 = por %p31, %p32
      %p34 = scmp.ne.s32.totalorder %s23, %s26
      %p35 = scmp.eq.s32.totalorder %s18, 1
      %p36 = por %p34, %p35
      %p37 = scmp.ne.s32.totalorder %s26, %s27
      %p38 = scmp.eq.s32.totalorder %s18, 0
      %p39 = por %p37, %p38
      %p40 = scmp.ne.s32.totalorder %s26, %s27
      %p41 = scmp.eq.s32.totalorder %s19, 1
      %p42 = por %p40, %p41
      %p44 = scmp.ne.s32.totalorder %s27, %s43
      %p45 = scmp.eq.s32.totalorder %s19, 0
      %p46 = por %p44, %p45
      %s47 = ssub.s32 %s13, %s20
      %p48 = scmp.eq.s32.totalorder %s47, 0
      %s50 = sadd.s32 %s49, 1
      %s51 = scalar_select %p48, %s49, %s50
      %p54 = pneg %p48
      %p55 = scmp.eq.s32.totalorder %s13, 1
      %p56 = por %p54, %p55
      %p57 = scmp.ne.s32.totalorder %s49, %s52
      %p58 = scmp.eq.s32.totalorder %s13, 0
      %p59 = por %p57, %p58
      %p60 = scmp.ne.s32.totalorder %s49, %s52
      %p61 = scmp.eq.s32.totalorder %s18, 1
      %p62 = por %p60, %p61
      %p63 = scmp.ne.s32.totalorder %s52, %s53
      %p64 = scmp.eq.s32.totalorder %s18, 0
      %p65 = por %p63, %p64
      %p66 = scmp.ne.s32.totalorder %s52, %s53
      %p67 = scmp.eq.s32.totalorder %s19, 1
      %p68 = por %p66, %p67
      %p70 = scmp.ne.s32.totalorder %s53, %s69
      %p71 = scmp.eq.s32.totalorder %s19, 0
      %p72 = por %p70, %p71
      %p73 = scmp.le.s32.totalorder 1, %s13
      %p74 = scmp.lt.s32.totalorder %s13, 3
      %p75 = pnand %p73, %p74
      %p76 = pneg %p75
      // Predicated region
      $region9: #{tpu_custom_call.1} parent=5 // pred_check
        _
      $region10: #{tpu_custom_call.1} parent=5 // pred_check_branch
        %78 = sbr.rel (%p75) target = $region12
      $region11: #{tpu_custom_call.1} parent=5 // pred_region
        %s79 = ssub.s32 %s13, 1
      $region12: #{tpu_custom_call.1} parent=5 // pred_fallthru
        _
      %p80 = scmp.lt.s32.totalorder %s13, 2
      // Predicated region
      $region13: #{tpu_custom_call.1} parent=5 // pred_check
        %p81 = pneg %p80
      $region14: #{tpu_custom_call.1} parent=5 // pred_check_branch
        %83 = sbr.rel (%p81) target = $region16
      $region15: #{tpu_custom_call.1} parent=5 // pred_region
        // Predicated region
        $region17: #{tpu_custom_call.1} parent=15 // pred_check
          %p84 = pneg %p33
        $region18: #{tpu_custom_call.1} parent=15 // pred_check_branch
          %86 = sbr.rel (%p84) target = $region20
        $region19: #{tpu_custom_call.1} parent=15 // pred_region
          %s87 = sand.u32 %s23, 1
          %s88 = scalar_lea.sflag [#allocation3], %s87
          %s89 = sand.u32 %s23, 1
          %s90 = smul.addr %s89, 8
          %s91 = scalar_lea.vmem [#allocation2], %s90
          %s93 = ssub.s32 128, 128
          %94 = vsyncadd %s88, %s93
          %s95 = smul.addr %s13, 128
          %s96 = scalar_lea.hbm %s0, %s95
          %s98 = sshll.u32 %s91, 4
          %s99 = int_to_ptr.vmem [resolvable:$true] %s98
          %101 = dma.hbm_to_vmem [thread:$0]  %s96, 128, %s99, %s88
        $region20: #{tpu_custom_call.1} parent=15 // pred_fallthru
          _
      $region16: #{tpu_custom_call.1} parent=5 // pred_fallthru
        _
      %p102 = scmp.le.s32.totalorder 1, %s13
      %p103 = scmp.lt.s32.totalorder %s13, 3
      %p104 = pnand %p102, %p103
      %p105 = pneg %p104
      // Predicated region
      $region21: #{tpu_custom_call.1} parent=5 // pred_check
        _
      $region22: #{tpu_custom_call.1} parent=5 // pred_check_branch
        %107 = sbr.rel (%p104) target = $region24
      $region23: #{tpu_custom_call.1} parent=5 // pred_region
        %s108 = ssub.s32 %s13, 1
        %s109 = sand.u32 %s26, 1
        %s110 = scalar_lea.sflag [#allocation3], %s109
        %s111 = sand.u32 %s26, 1
        %s112 = smul.addr %s111, 8
        %s113 = scalar_lea.vmem [#allocation2], %s112
        // Predicated region
        $region25: #{tpu_custom_call.1} parent=23 // pred_check
          %p114 = pneg %p39
        $region26: #{tpu_custom_call.1} parent=23 // pred_check_branch
          %116 = sbr.rel (%p114) target = $region28
        $region27: #{tpu_custom_call.1} parent=23 // pred_region
          %117 = dma.done %s110, 128
        $region28: #{tpu_custom_call.1} parent=23 // pred_fallthru
          _
        %s118 = sand.u32 %s26, 1
        %s119 = scalar_lea.sflag [#allocation3], %s118
        %s120 = sand.u32 %s26, 1
        %s121 = smul.addr %s120, 8
        %s122 = scalar_lea.vmem [#allocation2], %s121
        %p123 = pneg %p39
        %p124 = pneg %p36
        %p125 = pneg %p65
        %p126 = pneg %p62
        %s127 = sand.u32 %s52, 1
        %s128 = scalar_lea.sflag [#allocation4], %s127
        %s129 = sand.u32 %s52, 1
        %s130 = smul.addr %s129, 8
        %s131 = scalar_lea.vmem [#allocation5], %s130
        %v132 = vld [vmem:[%s113] sm:$0xff]
        %v133 = vand.u32 2147483647, %v132
        %v134 = vmul.f32 %v133, 2.0
        %v135 = vsub.f32 1.0, %v134
        %v136 = vmul.f32 %v135, 1.442695
        %v137 = vpow.pop %v136
        %v138 = vmul.f32 %v137, 0.5
        %v139 = vsub.f32 %v138, 1.0
        %vm140 = vcmp.lt.f32.partialorder %v132, 0.0
        %v141 = vsub.f32 0.0, %v139
        %v142 = vsel %vm140, %v139, %v141
        %vm143 = vcmp.gt.f32.partialorder %v133, 0.5
        %v144 = vsel %vm143, %v142, %v132
        %145 = vst [vmem:[%s131] sm:$0xff] %v144
        %s146 = sand.u32 %s52, 1
        %s147 = scalar_lea.sflag [#allocation4], %s146
        %s148 = sand.u32 %s52, 1
        %s149 = smul.addr %s148, 8
        %s150 = scalar_lea.vmem [#allocation5], %s149
        // Predicated region
        $region29: #{tpu_custom_call.1} parent=23 // pred_check
          %p151 = pneg %p62
        $region30: #{tpu_custom_call.1} parent=23 // pred_check_branch
          %153 = sbr.rel (%p151) target = $region32
        $region31: #{tpu_custom_call.1} parent=23 // pred_region
          %s155 = ssub.s32 128, 128
          %156 = vsyncadd %s147, %s155
          %s157 = smul.addr %s18, 128
          %s158 = scalar_lea.hbm %s1, %s157
          %s160 = sshll.u32 %s150, 4
          %s161 = int_to_ptr.vmem [resolvable:$true] %s160
          %163 = dma.vmem_to_hbm [thread:$0]  %s161, 128, %s158, %s147
        $region32: #{tpu_custom_call.1} parent=23 // pred_fallthru
          _
      $region24: #{tpu_custom_call.1} parent=5 // pred_fallthru
        _
      %p164 = scmp.le.s32.totalorder 2, %s13
      // Predicated region
      $region33: #{tpu_custom_call.1} parent=5 // pred_check
        %p165 = pneg %p164
      $region34: #{tpu_custom_call.1} parent=5 // pred_check_branch
        %167 = sbr.rel (%p165) target = $region36
      $region35: #{tpu_custom_call.1} parent=5 // pred_region
        %s168 = ssub.s32 %s13, 2
        // Predicated region
        $region37: #{tpu_custom_call.1} parent=35 // pred_check
          %p169 = pneg %p68
        $region38: #{tpu_custom_call.1} parent=35 // pred_check_branch
          %171 = sbr.rel (%p169) target = $region40
        $region39: #{tpu_custom_call.1} parent=35 // pred_region
          %s172 = sand.u32 %s53, 1
          %s173 = scalar_lea.sflag [#allocation4], %s172
          %s174 = sand.u32 %s53, 1
          %s175 = smul.addr %s174, 8
          %s176 = scalar_lea.vmem [#allocation5], %s175
          %177 = dma.done %s173, 128
        $region40: #{tpu_custom_call.1} parent=35 // pred_fallthru
          _
      $region36: #{tpu_custom_call.1} parent=5 // pred_fallthru
        _
    $region6: #{tpu_custom_call.1} parent=1 // loop_footer
      %s17 = sadd.s32 1, %s13
    $region7: #{tpu_custom_call.1} parent=1 // loop_footer_branch
      %12 = sbr.rel target = $region3
    $region8: #{tpu_custom_call.1} parent=1 // loop_exit
      _
    %178 = vsyncpa [#allocation3], 1
    %s179 = scalar_lea.sflag [#allocation3], 1
    %180 = vsyncpa %s179, 1
    %181 = vsyncpa [#allocation4], 1
    %s182 = scalar_lea.sflag [#allocation4], 1
    %183 = vsyncpa %s182, 1

</llo_original>
